<compile_context>
chip_gen: v7x
topology: tpu7x:2x2x1
jax: 0.10.0
libtpu: 0.0.40
codegen_flags: <defaults>
</compile_context>

<pallas_src>
import functools

import jax
import jax.numpy as jnp
from jax.experimental import pallas as pl
from jax.experimental.pallas import tpu as pltpu


# --------------------------------------------------------------------------- #
# Kernels
# --------------------------------------------------------------------------- #
def _kv_kernel(x_ref, wkv1_ref, wk2_ref, bk_ref, k_ref, vt_ref, *, ckp):
    """Per-token-tile K / V^T projection (runs once per batch over token tiles)."""
    f32 = jnp.float32
    bf16 = jnp.bfloat16

    x = x_ref[0]                                   # (Cin, TL) bf16
    bk = bk_ref[...]                               # (CkP, 2)  f32: [bk1 | bk2]

    # Fused stage-1 GEMM: [wk1 | wv] @ x, f32 accumulation.
    h = jnp.dot(wkv1_ref[...], x, preferred_element_type=f32)     # (CkP+CvP, TL)
    k1 = jnp.maximum(h[:ckp] + bk[:, 0:1], 0.0)                   # (CkP, TL)
    v = h[ckp:]                                                   # (CvP, TL) (no bias/relu)
    k = jnp.maximum(jnp.dot(wk2_ref[...], k1.astype(bf16),
                            preferred_element_type=f32) + bk[:, 1:2], 0.0)

    k_ref[0] = k.astype(k_ref.dtype)               # (CkP, TL) lane-dense bf16
    vt_ref[0] = v.T.astype(vt_ref.dtype)           # (TL, CvP) bf16, pre-transposed


def _attn_kernel(xq_ref, k_ref, vt_ref, wq1_ref, wq2_ref, ww_ref, b_ref, o_ref,
                 *, valid_len, use_bf16_exp):
    """Per-query-tile attention: Q projection, softmax, ctx, output head."""
    f32 = jnp.float32
    bf16 = jnp.bfloat16

    ckp = wq1_ref.shape[0]
    cout = o_ref.shape[1]

    x_q = xq_ref[0]                                # (Cin, TQ)  bf16
    k = k_ref[0]                                   # (CkP, Lp)  bf16, resident along q
    vt = vt_ref[0]                                 # (Lp, CvP)  bf16, resident along q
    b = b_ref[...]                                 # (bmax, 3)  f32: [bq1 | bq2*s | bw]

    # Query branch (this tile only); scale already folded into wq2 / bq2.
    q1 = jnp.maximum(jnp.dot(wq1_ref[...], x_q, preferred_element_type=f32)
                     + b[:ckp, 0:1], 0.0)                          # (CkP, TQ)
    q = jnp.maximum(jnp.dot(wq2_ref[...], q1.astype(bf16),
                            preferred_element_type=f32) + b[:ckp, 1:2], 0.0)

    # sim[t, l] = sum_c q[c, t] * k[c, l]  (only the small (CkP, TQ) tile transposes)
    sim = jnp.dot(q.T.astype(bf16), k, preferred_element_type=f32)  # (TQ, Lp)

    if valid_len is not None:                      # mask zero-padded key columns
        col = jax.lax.broadcasted_iota(jnp.int32, sim.shape, 1)
        sim = jnp.where(col < valid_len, sim, -1e30)

    sim = sim - jnp.max(sim, axis=-1, keepdims=True)
    if use_bf16_exp:                               # v6e / v7x: bf16 EUP path
        p = jnp.exp(sim.astype(bf16))
    else:                                          # v5e: f32 only
        p = jnp.exp(sim)
    row_sum = jnp.sum(p.astype(f32), axis=-1, keepdims=True)        # (TQ, 1) f32

    # Deferred normalization: ctx^T = p @ V^T (canonical MXU layout), then rescale
    # only the small (TQ, CvP) tile by the per-query reciprocal.
    ctx_t = jnp.dot(p.astype(bf16), vt, preferred_element_type=f32)  # (TQ, CvP)
    ctx_t = ctx_t * pl.reciprocal(row_sum, approx=True)

    # Output head: relu(W^T ctx + bw), lane-dense (Cout, TQ) store.
    out = jax.lax.dot_general(ww_ref[...], ctx_t.astype(bf16),
                              dimension_numbers=(((1,), (1,)), ((), ())),
                              preferred_element_type=f32)            # (Cout, TQ)
    out = jnp.maximum(out + b[:cout, 2:3], 0.0)
    o_ref[0] = out.astype(o_ref.dtype)


# --------------------------------------------------------------------------- #
# Host-side preparation + wrapper
# --------------------------------------------------------------------------- #
def _round_up(x, m):
    return (x + m - 1) // m * m


def _pick_tile(l_pad, want):
    """Largest multiple of 128 that divides l_pad and is <= max(want, 128)."""
    want = max(128, min(want, l_pad))
    t = (want // 128) * 128
    while l_pad % t != 0:
        t -= 128
    return t


def _chip_flags():
    kind = ""
    try:
        kind = jax.devices()[0].device_kind.lower()
    except Exception:
        pass
    is_v7 = ("v7" in kind) or ("tpu7" in kind) or ("7x" in kind)
    use_bf16_exp = ("v6" in kind) or is_v7
    if is_v7:
        vmem = 48 * 1024 * 1024          # 64 MiB physical per TC on v7x
    elif ("v5" in kind) or ("v6" in kind):
        vmem = 96 * 1024 * 1024          # 128 MiB physical
    else:
        vmem = 64 * 1024 * 1024
    return use_bf16_exp, vmem


def _prep_arrays(params, key_channels):
    """Pad channels to sublane multiples, fold scale, pack biases, cast to bf16."""
    f32 = jnp.float32
    bf16 = jnp.bfloat16
    cin = params["wq1"].shape[0]
    ck = params["wq1"].shape[1]
    cv = params["wv"].shape[1]
    cout = params["ww"].shape[1]
    ckp = _round_up(ck, 8)
    cvp = _round_up(cv, 8)
    scale = float(key_channels) ** -0.5

    def padw(w, rows, cols):
        return jnp.pad(w, ((0, rows - w.shape[0]), (0, cols - w.shape[1])))

    wq1 = padw(params["wq1"].T, ckp, cin).astype(bf16)                   # (CkP, Cin)
    wk1 = padw(params["wk1"].T, ckp, cin)
    wv = padw(params["wv"].T, cvp, cin)
    wkv1 = jnp.concatenate([wk1, wv], axis=0).astype(bf16)               # (CkP+CvP, Cin)
    wk2 = padw(params["wk2"].T, ckp, ckp).astype(bf16)                   # (CkP, CkP)
    wq2s = (padw(params["wq2"].T, ckp, ckp) * scale).astype(bf16)        # scale folded
    ww = padw(params["ww"].T, cout, cvp).astype(bf16)                    # (Cout, CvP)

    padv = lambda v, n: jnp.pad(v, (0, n - v.shape[0]))
    bk = jnp.stack([padv(params["bk1"], ckp),
                    padv(params["bk2"], ckp)], axis=1).astype(f32)       # (CkP, 2)
    bmax = max(ckp, cout)
    bq = jnp.stack([padv(params["bq1"], bmax),
                    padv(params["bq2"] * scale, bmax),                   # scale folded
                    padv(params["bw"], bmax)], axis=1).astype(f32)       # (bmax, 3)

    return dict(wkv1=wkv1, wk2=wk2, wq1=wq1, wq2s=wq2s, ww=ww, bk=bk, bq=bq,
                ckp=ckp, cvp=cvp, cout=cout, cin=cin)


def self_attention_block_2d(x_nchw, params, key_channels, *, tq=256, tl=256):
    """x_nchw: (B, Cin, H, W) float32.  Returns (B, Cout, H, W)."""
    B, Cin, H, W = x_nchw.shape
    L = H * W
    arrs = _prep_arrays(params, key_channels)
    ckp, cvp, cout = arrs["ckp"], arrs["cvp"], arrs["cout"]

    l_pad = _round_up(L, 128)
    x_bcl = x_nchw.reshape(B, Cin, L)                    # channel-major, free reshape
    if l_pad != L:
        x_bcl = jnp.pad(x_bcl, ((0, 0), (0, 0), (0, l_pad - L)))
    x_bf = x_bcl.astype(jnp.bfloat16)

    tl = _pick_tile(l_pad, tl)
    tq = _pick_tile(l_pad, tq)
    use_bf16_exp, vmem_bytes = _chip_flags()
    const2 = lambda b, t: (0, 0)
    cparams = pltpu.CompilerParams(
        dimension_semantics=("parallel", "parallel"),
        vmem_limit_bytes=vmem_bytes)

    # --- Kernel A: K and V^T, computed once per batch (never per query tile). ---
    k_bf, vt_bf = pl.pallas_call(
        functools.partial(_kv_kernel, ckp=ckp),
        out_shape=(jax.ShapeDtypeStruct((B, ckp, l_pad), jnp.bfloat16),
                   jax.ShapeDtypeStruct((B, l_pad, cvp), jnp.bfloat16)),
        grid=(B, l_pad // tl),
        in_specs=[
            pl.BlockSpec((1, Cin, tl), lambda b, t: (b, 0, t)),   # x token tile
            pl.BlockSpec((ckp + cvp, Cin), const2),               # fused [wk1 | wv]^T
            pl.BlockSpec((ckp, ckp), const2),                     # wk2^T
            pl.BlockSpec((ckp, 2), const2),                       # packed [bk1 | bk2]
        ],
        out_specs=(pl.BlockSpec((1, ckp, tl), lambda b, t: (b, 0, t)),
                   pl.BlockSpec((1, tl, cvp), lambda b, t: (b, t, 0))),
        compiler_params=cparams,
    )(x_bf, arrs["wkv1"], arrs["wk2"], arrs["bk"])

    # --- Kernel B: attention over query tiles; K / V^T stay resident along q. ---
    bmax = arrs["bq"].shape[0]
    valid_len = L if l_pad != L else None
    out_bcl = pl.pallas_call(
        functools.partial(_attn_kernel, valid_len=valid_len,
                          use_bf16_exp=use_bf16_exp),
        out_shape=jax.ShapeDtypeStruct((B, cout, l_pad), x_nchw.dtype),
        grid=(B, l_pad // tq),
        in_specs=[
            pl.BlockSpec((1, Cin, tq), lambda b, q: (b, 0, q)),       # x query tile
            pl.BlockSpec((1, ckp, l_pad), lambda b, q: (b, 0, 0)),    # K (resident)
            pl.BlockSpec((1, l_pad, cvp), lambda b, q: (b, 0, 0)),    # V^T (resident)
            pl.BlockSpec((ckp, Cin), const2),                         # wq1^T
            pl.BlockSpec((ckp, ckp), const2),                         # wq2^T * scale
            pl.BlockSpec((cout, cvp), const2),                        # ww^T
            pl.BlockSpec((bmax, 3), const2),                          # packed biases
        ],
        out_specs=pl.BlockSpec((1, cout, tq), lambda b, q: (b, 0, q)),
        compiler_params=cparams,
    )(x_bf, k_bf, vt_bf, arrs["wq1"], arrs["wq2s"], arrs["ww"], arrs["bq"])

    return out_bcl[:, :, :L].reshape(B, cout, H, W)


# --------------------------------------------------------------------------- #
# Parameter construction (eval-mode BN folded) and references
# --------------------------------------------------------------------------- #
def _fold_bn(w, gamma, beta, mean, var, eps=1e-5):
    """Fold eval-mode BatchNorm into a (Cin, Cout) 1x1-conv weight -> (w', bias)."""
    s = gamma / jnp.sqrt(var + eps)
    return (w * s[None, :]).astype(jnp.float32), (beta - mean * s).astype(jnp.float32)


def make_params(key, in_channels, key_channels, value_channels, out_channels):
    ks = jax.random.split(key, 11)

    def conv_w(k, cin, cout):
        return jax.random.normal(k, (cin, cout), jnp.float32) * (1.0 / cin) ** 0.5

    def bn_params(k, c):
        g = 1.0 + 0.1 * jax.random.normal(k, (c,), jnp.float32)
        b = 0.05 * jnp.arange(c, dtype=jnp.float32)
        m = 0.02 * jnp.arange(c, dtype=jnp.float32) - 0.01
        v = jnp.ones((c,), jnp.float32) + 0.01 * jnp.arange(c, dtype=jnp.float32)
        return g, b, m, v

    wq1, bq1 = _fold_bn(conv_w(ks[0], in_channels, key_channels), *bn_params(ks[1], key_channels))
    wq2, bq2 = _fold_bn(conv_w(ks[2], key_channels, key_channels), *bn_params(ks[3], key_channels))
    wk1, bk1 = _fold_bn(conv_w(ks[4], in_channels, key_channels), *bn_params(ks[5], key_channels))
    wk2, bk2 = _fold_bn(conv_w(ks[6], key_channels, key_channels), *bn_params(ks[7], key_channels))
    wv = conv_w(ks[8], in_channels, value_channels)
    ww, bw = _fold_bn(conv_w(ks[9], value_channels, out_channels), *bn_params(ks[10], out_channels))

    return dict(wq1=wq1, bq1=bq1, wq2=wq2, bq2=bq2,
                wk1=wk1, bk1=bk1, wk2=wk2, bk2=bk2,
                wv=wv, ww=ww, bw=bw)


def _reference_f32(x_nchw, p, key_channels):
    """Pure-JAX f32 reference of the BN-folded, eval-mode forward (module semantics)."""
    B, Cin, H, W = x_nchw.shape
    L = H * W
    hi = jax.lax.Precision.HIGHEST
    x = x_nchw.reshape(B, Cin, L)

    def proj(w, b, z):
        return jax.nn.relu(jnp.einsum("ck,bcl->bkl", w, z, precision=hi) + b[None, :, None])

    q = proj(p["wq2"], p["bq2"], proj(p["wq1"], p["bq1"], x))
    k = proj(p["wk2"], p["bk2"], proj(p["wk1"], p["bk1"], x))
    v = jnp.einsum("cv,bcl->bvl", p["wv"], x, precision=hi)
    sim = jnp.einsum("bcq,bck->bqk", q, k, precision=hi) * (float(key_channels) ** -0.5)
    sim = jax.nn.softmax(sim, axis=-1)
    ctx = jnp.einsum("bqk,bvk->bvq", sim, v, precision=hi)
    out = jax.nn.relu(jnp.einsum("vo,bvq->boq", p["ww"], ctx, precision=hi)
                      + p["bw"][None, :, None])
    return out.reshape(B, p["ww"].shape[1], H, W)


def _reference_bf16_mirror(x_nchw, params, key_channels, use_bf16_exp):
    """Mirrors the kernels' dtype strategy (bf16 operands / exp, f32 accumulation)."""
    f32, bf = jnp.float32, jnp.bfloat16
    arrs = _prep_arrays(params, key_channels)
    ckp, cout = arrs["ckp"], arrs["cout"]
    B, Cin, H, W = x_nchw.shape
    L = H * W
    x = x_nchw.reshape(B, Cin, L).astype(bf)

    h = jnp.einsum("kc,bcl->bkl", arrs["wkv1"], x, preferred_element_type=f32)
    k1 = jax.nn.relu(h[:, :ckp] + arrs["bk"][None, :, 0:1])
    v = h[:, ckp:]
    k = jax.nn.relu(jnp.einsum("kj,bjl->bkl", arrs["wk2"], k1.astype(bf),
                               preferred_element_type=f32) + arrs["bk"][None, :, 1:2]).astype(bf)
    vt = jnp.swapaxes(v, 1, 2).astype(bf)

    q1 = jax.nn.relu(jnp.einsum("kc,bcl->bkl", arrs["wq1"], x, preferred_element_type=f32)
                     + arrs["bq"][None, :ckp, 0:1])
    q = jax.nn.relu(jnp.einsum("kj,bjl->bkl", arrs["wq2s"], q1.astype(bf),
                               preferred_element_type=f32) + arrs["bq"][None, :ckp, 1:2]).astype(bf)

    sim = jnp.einsum("bkq,bkl->bql", q, k, preferred_element_type=f32)
    sim = sim - jnp.max(sim, axis=-1, keepdims=True)
    p = jnp.exp(sim.astype(bf)) if use_bf16_exp else jnp.exp(sim)
    rs = jnp.sum(p.astype(f32), axis=-1, keepdims=True)
    ctx_t = jnp.einsum("bql,blv->bqv", p.astype(bf), vt, preferred_element_type=f32) / rs
    out = jax.nn.relu(jnp.einsum("ov,bqv->boq", arrs["ww"], ctx_t.astype(bf),
                                 preferred_element_type=f32) + arrs["bq"][None, :cout, 2:3])
    return out.reshape(B, cout, H, W)


# --------------------------------------------------------------------------- #
# Self-test
# --------------------------------------------------------------------------- #
if __name__ == "__main__":
    key_channels, value_channels = 16, 16
    B, Cin, H, W = 2, 8, 16, 16
    out_channels = Cin  # out_channels=None -> in_channels in the PyTorch module

    root = jax.random.PRNGKey(0)
    kx, kp, kx2 = jax.random.split(root, 3)
    x = jax.random.normal(kx, (B, Cin, H, W), jnp.float32)
    params = make_params(kp, Cin, key_channels, value_channels, out_channels)
    use_bf16_exp, _ = _chip_flags()

    # Case 1: L = 256 with 128-token tiles -> exercises multi-tile query/token grids.
    out = jax.block_until_ready(
        self_attention_block_2d(x, params, key_channels, tq=128, tl=128))
    assert out.shape == (B, out_channels, H, W)

    ref_m = _reference_bf16_mirror(x, params, key_channels, use_bf16_exp)
    err_m = float(jnp.max(jnp.abs(out - ref_m)))
    assert jnp.allclose(out, ref_m, atol=5e-2, rtol=5e-2), err_m

    ref_f = _reference_f32(x, params, key_channels)
    err_f = float(jnp.max(jnp.abs(out - ref_f)))
    assert jnp.allclose(out, ref_f, atol=3.5e-1, rtol=3.5e-1), err_f

    # Case 2: L = 90 (non-multiple of 128) -> exercises padding + key masking.
    B2, H2, W2 = 1, 9, 10
    x2 = jax.random.normal(kx2, (B2, Cin, H2, W2), jnp.float32)
    out2 = jax.block_until_ready(self_attention_block_2d(x2, params, key_channels))
    assert out2.shape == (B2, out_channels, H2, W2)
    ref_m2 = _reference_bf16_mirror(x2, params, key_channels, use_bf16_exp)
    err_m2 = float(jnp.max(jnp.abs(out2 - ref_m2)))
    assert jnp.allclose(out2, ref_m2, atol=5e-2, rtol=5e-2), err_m2

    print("KERNEL_OK")
</pallas_src>

<mosaic_0001>
module attributes {stable_mosaic.version = 11 : i64} {
  func.func @_kv_kernel(%arg0: i32, %arg1: i32, %arg2: memref<1x8x128xbf16, #tpu.memory_space<vmem>>, %arg3: memref<32x8xbf16, #tpu.memory_space<vmem>>, %arg4: memref<16x16xbf16, #tpu.memory_space<vmem>>, %arg5: memref<16x2xf32, #tpu.memory_space<vmem>>, %arg6: memref<1x16x128xbf16, #tpu.memory_space<vmem>>, %arg7: memref<1x128x16xbf16, #tpu.memory_space<vmem>>) attributes {dimension_semantics = [#tpu.dimension_semantics<parallel>, #tpu.dimension_semantics<parallel>], iteration_bounds = array<i64: 2, 2>, scalar_prefetch = 0 : i64, scratch_operands = 0 : i64, tpu.core_type = #tpu.core_type<tc>, window_params = [{transform_indices = @transform_0, window_bounds = array<i64: 1, 8, 128>}, {pipeline_mode = #tpu.pipeline_mode<synchronous>, transform_indices = @transform_1, window_bounds = array<i64: 32, 8>}, {pipeline_mode = #tpu.pipeline_mode<synchronous>, transform_indices = @transform_2, window_bounds = array<i64: 16, 16>}, {pipeline_mode = #tpu.pipeline_mode<synchronous>, transform_indices = @transform_3, window_bounds = array<i64: 16, 2>}, {transform_indices = @transform_4, window_bounds = array<i64: 1, 16, 128>}, {transform_indices = @transform_5, window_bounds = array<i64: 1, 128, 16>}]} {
    %c0 = arith.constant 0 : index
    %c0_0 = arith.constant 0 : index
    %c0_1 = arith.constant 0 : index
    %0 = vector.load %arg2[%c0, %c0_0, %c0_1] : memref<1x8x128xbf16, #tpu.memory_space<vmem>>, vector<1x8x128xbf16>
    %1 = vector.shape_cast %0 : vector<1x8x128xbf16> to vector<8x128xbf16>
    %c0_2 = arith.constant 0 : index
    %c0_3 = arith.constant 0 : index
    %2 = vector.load %arg5[%c0_2, %c0_3] : memref<16x2xf32, #tpu.memory_space<vmem>>, vector<16x2xf32>
    %c0_4 = arith.constant 0 : index
    %c0_5 = arith.constant 0 : index
    %3 = vector.load %arg3[%c0_4, %c0_5] : memref<32x8xbf16, #tpu.memory_space<vmem>>, vector<32x8xbf16>
    %cst = arith.constant dense<0.000000e+00> : vector<32x128xf32>
    %4 = tpu.matmul %3, %1, %cst {dimension_numbers = #tpu.dot_dimension_numbers<[1], [0], [0], [1], [0, 0, 1, 1], [], []>} : vector<32x8xbf16>, vector<8x128xbf16>, vector<32x128xf32> -> vector<32x128xf32>
    %5 = vector.extract_strided_slice %4 {offsets = [0, 0], sizes = [16, 128], strides = [1, 1]} : vector<32x128xf32> to vector<16x128xf32>
    %6 = vector.extract_strided_slice %2 {offsets = [0, 0], sizes = [16, 1], strides = [1, 1]} : vector<16x2xf32> to vector<16x1xf32>
    %7 = vector.broadcast %6 : vector<16x1xf32> to vector<16x128xf32>
    %8 = arith.addf %5, %7 : vector<16x128xf32>
    %cst_6 = arith.constant 0.000000e+00 : f32
    %9 = vector.broadcast %cst_6 : f32 to vector<16x128xf32>
    %10 = arith.maximumf %8, %9 : vector<16x128xf32>
    %11 = vector.extract_strided_slice %4 {offsets = [16, 0], sizes = [16, 128], strides = [1, 1]} : vector<32x128xf32> to vector<16x128xf32>
    %c0_7 = arith.constant 0 : index
    %c0_8 = arith.constant 0 : index
    %12 = vector.load %arg4[%c0_7, %c0_8] : memref<16x16xbf16, #tpu.memory_space<vmem>>, vector<16x16xbf16>
    %13 = arith.truncf %10 : vector<16x128xf32> to vector<16x128xbf16>
    %cst_9 = arith.constant dense<0.000000e+00> : vector<16x128xf32>
    %14 = tpu.matmul %12, %13, %cst_9 {dimension_numbers = #tpu.dot_dimension_numbers<[1], [0], [0], [1], [0, 0, 1, 1], [], []>} : vector<16x16xbf16>, vector<16x128xbf16>, vector<16x128xf32> -> vector<16x128xf32>
    %15 = vector.extract_strided_slice %2 {offsets = [0, 1], sizes = [16, 1], strides = [1, 1]} : vector<16x2xf32> to vector<16x1xf32>
    %16 = vector.broadcast %15 : vector<16x1xf32> to vector<16x128xf32>
    %17 = arith.addf %14, %16 : vector<16x128xf32>
    %cst_10 = arith.constant 0.000000e+00 : f32
    %18 = vector.broadcast %cst_10 : f32 to vector<16x128xf32>
    %19 = arith.maximumf %17, %18 : vector<16x128xf32>
    %20 = arith.truncf %19 : vector<16x128xf32> to vector<16x128xbf16>
    %c0_11 = arith.constant 0 : index
    %c0_12 = arith.constant 0 : index
    %c0_13 = arith.constant 0 : index
    %21 = vector.load %arg6[%c0_11, %c0_12, %c0_13] : memref<1x16x128xbf16, #tpu.memory_space<vmem>>, vector<1x16x128xbf16>
    %22 = vector.shape_cast %21 : vector<1x16x128xbf16> to vector<16x128xbf16>
    %23 = vector.shape_cast %20 : vector<16x128xbf16> to vector<1x16x128xbf16>
    tpu.vector_store %arg6[%c0_11, %c0_12, %c0_13], %23 {strides = array<i32>} : memref<1x16x128xbf16, #tpu.memory_space<vmem>>, vector<1x16x128xbf16>,
    %24 = tpu.transpose %11, [1, 0] : vector<16x128xf32> -> vector<128x16xf32>
    %25 = arith.truncf %24 : vector<128x16xf32> to vector<128x16xbf16>
    %c0_14 = arith.constant 0 : index
    %c0_15 = arith.constant 0 : index
    %c0_16 = arith.constant 0 : index
    %26 = vector.load %arg7[%c0_14, %c0_15, %c0_16] : memref<1x128x16xbf16, #tpu.memory_space<vmem>>, vector<1x128x16xbf16>
    %27 = vector.shape_cast %26 : vector<1x128x16xbf16> to vector<128x16xbf16>
    %28 = vector.shape_cast %25 : vector<128x16xbf16> to vector<1x128x16xbf16>
    tpu.vector_store %arg7[%c0_14, %c0_15, %c0_16], %28 {strides = array<i32>} : memref<1x128x16xbf16, #tpu.memory_space<vmem>>, vector<1x128x16xbf16>,
    return
  }
  func.func @transform_0(%arg0: i32, %arg1: i32) -> (i32, i32, i32) {
    %c0_i32 = arith.constant 0 : i32
    %c0_i32_0 = arith.constant 0 : i32
    return %arg0, %c0_i32, %arg1 : i32, i32, i32
  }
  func.func @transform_1(%arg0: i32, %arg1: i32) -> (i32, i32) {
    %c0_i32 = arith.constant 0 : i32
    %c0_i32_0 = arith.constant 0 : i32
    %c0_i32_1 = arith.constant 0 : i32
    return %c0_i32, %c0_i32_0 : i32, i32
  }
  func.func @transform_2(%arg0: i32, %arg1: i32) -> (i32, i32) {
    %c0_i32 = arith.constant 0 : i32
    %c0_i32_0 = arith.constant 0 : i32
    %c0_i32_1 = arith.constant 0 : i32
    return %c0_i32, %c0_i32_0 : i32, i32
  }
  func.func @transform_3(%arg0: i32, %arg1: i32) -> (i32, i32) {
    %c0_i32 = arith.constant 0 : i32
    %c0_i32_0 = arith.constant 0 : i32
    %c0_i32_1 = arith.constant 0 : i32
    return %c0_i32, %c0_i32_0 : i32, i32
  }
  func.func @transform_4(%arg0: i32, %arg1: i32) -> (i32, i32, i32) {
    %c0_i32 = arith.constant 0 : i32
    %c0_i32_0 = arith.constant 0 : i32
    return %arg0, %c0_i32, %arg1 : i32, i32, i32
  }
  func.func @transform_5(%arg0: i32, %arg1: i32) -> (i32, i32, i32) {
    %c0_i32 = arith.constant 0 : i32
    %c0_i32_0 = arith.constant 0 : i32
    return %arg0, %arg1, %c0_i32 : i32, i32, i32
  }
}

</mosaic_0001>

<llo_original>
// kernel: tpu_custom_call.1
$region0: #{tpu_custom_call.1}
  #allocation0 [shape = 'u32[]', space=smem, size = 0x4, offset = 0x4, fixed_abs, tag = 'smem constant byte address 0x4 - core index']
  #allocation1 [shape = 'u32[144,128]{1,0:T(1,128)}', space=vmem, size = 0x12000, scoped, tag = 'internal scratch']
  %s0 = inlined_call_operand.hbm [shape: bf16[2,8,256], index: 0, kind: input, shape index: {}]
  %s1 = inlined_call_operand.hbm [shape: bf16[32,8], index: 1, kind: input, shape index: {}]
  %s2 = inlined_call_operand.hbm [shape: bf16[16,16], index: 2, kind: input, shape index: {}]
  %s3 = inlined_call_operand.hbm [shape: f32[16,2], index: 3, kind: input, shape index: {}]
  %s4 = inlined_call_operand.hbm [shape: bf16[2,16,256], index: 4, kind: output, shape index: {0}]
  %s5 = inlined_call_operand.hbm [shape: bf16[2,256,16], index: 5, kind: output, shape index: {1}]
  %6 = xla_tuple %s4, %s5
  %s7 = sld [smem:[#allocation0]]
  $region73: #{tpu_custom_call.1} parent=0
    _
  %s9 = ssub.s32 1, %s7
  %s10 = scalar_select 0, %s9, %s7
  $region1: #{tpu_custom_call.1} parent=0
    #allocation2 [shape = 'u8[4096]{0}', space=vmem, size = 0x1000, scoped, tag = 'input window, operand 0']
    #allocation3 [shape = 's32[2]{0}', space=sflag, size = 0x8, scoped, tag = 'scoped memory for tpu_custom_call.1']
    #allocation4 [shape = 's32[2]{0}', space=sflag, size = 0x8, scoped, tag = 'scoped memory for tpu_custom_call.1']
    #allocation5 [shape = 'u8[8192]{0}', space=vmem, size = 0x2000, scoped, tag = 'input window, operand 1, single buffered']
    #allocation6 [shape = 's32[1]{0}', space=sflag, size = 0x4, scoped, tag = 'scoped memory for tpu_custom_call.1']
    #allocation7 [shape = 'u8[4096]{0}', space=vmem, size = 0x1000, scoped, tag = 'input window, operand 2, single buffered']
    #allocation8 [shape = 'u8[8192]{0}', space=vmem, size = 0x2000, scoped, tag = 'input window, operand 3, single buffered']
    #allocation9 [shape = 's32[1]{0}', space=sflag, size = 0x4, scoped, tag = 'scoped memory for tpu_custom_call.1']
    #allocation10 [shape = 'u8[8192]{0}', space=vmem, size = 0x2000, scoped, tag = 'output window, operand 0']
    #allocation11 [shape = 'u8[65536]{0}', space=vmem, size = 0x10000, scoped, tag = 'output window, operand 1']
    #allocation12 [shape = 's32[2]{0}', space=sflag, size = 0x8, scoped, tag = 'scoped memory for tpu_custom_call.1']
    %11 = vsyncpa [#allocation3], 0
    %s12 = scalar_lea.sflag [#allocation3], 1
    %13 = vsyncpa %s12, 0
    %14 = vsyncpa [#allocation6], 0
    %15 = vsyncpa [#allocation9], 0
    %16 = vsyncpa [#allocation4], 0
    %s17 = scalar_lea.sflag [#allocation4], 1
    %18 = vsyncpa %s17, 0
    %19 = vsyncpa [#allocation12], 0
    %s20 = scalar_lea.sflag [#allocation12], 1
    %21 = vsyncpa %s20, 0
    loop: start=0, step=1, limit=6
    $region2: #{tpu_custom_call.1} parent=1 // loop_pre_header
      _
    $region3: #{tpu_custom_call.1} parent=1 // loop_header
      %s23 = sphi 0, %s27
      %p24 = scmp.ge.s32.totalorder %s23, 6
      %s30 = sphi 0, %s42
      %s31 = sphi 0, %s38
      %s32 = sphi 0, %s30
      %s33 = sphi 0, %s31
      %s34 = sphi 0, %s32
      %s35 = sphi 0, %s33
      %s47 = sphi 0, %s49
      %s50 = sphi 0, %s47
      %s51 = sphi 0, %s50
      %s67 = sphi 0, %s51
      %s71 = sphi 0, %s71
      %s73 = sphi 0, %s71
      %s74 = sphi 0, %s73
      %s88 = sphi 0, %s74
      %s92 = sphi 0, %s92
      %s94 = sphi 0, %s92
      %s95 = sphi 0, %s94
      %s109 = sphi 0, %s95
      %s113 = sphi 0, %s113
      %s115 = sphi 0, %s113
      %s116 = sphi 0, %s115
      %s130 = sphi 0, %s116
      %s138 = sphi 0, %s140
      %s141 = sphi 0, %s138
      %s142 = sphi 0, %s141
      %s158 = sphi 0, %s142
      %s166 = sphi 0, %s168
      %s169 = sphi 0, %s166
      %s170 = sphi 0, %s169
      %s186 = sphi 0, %s170
    $region4: #{tpu_custom_call.1} parent=1 // loop_header_branch
      %26 = sbr.rel (%p24) target = $region8
    $region5: #{tpu_custom_call.1} parent=1 // loop_body
      %s28 = ssub.s32 %s23, 1
      %s29 = ssub.s32 %s23, 2
      %s36 = sadd.s32 1, %s31
      %p37 = scmp.ge.s32.totalorder %s36, 2
      %s38 = scalar_select %p37, 0, %s36
      %s39 = sadd.s32 1, %s30
      %s40 = scalar_select %p37, %s39, %s30
      %p41 = scmp.ge.s32.totalorder %s40, 2
      %s42 = scalar_select %p41, 0, %s40
      %s43 = ssub.s32 %s30, %s42
      %s44 = ssub.s32 %s31, %s38
      %s45 = sor.u32 %s43, %s44
      %p46 = scmp.eq.s32.totalorder %s45, 0
      %s48 = sadd.s32 %s47, 1
      %s49 = scalar_select %p46, %s47, %s48
      %p52 = pneg %p46
      %p53 = scmp.eq.s32.totalorder %s23, 3
      %p54 = por %p52, %p53
      %p55 = scmp.ne.s32.totalorder %s47, %s50
      %p56 = scmp.eq.s32.totalorder %s23, 0
      %p57 = por %p55, %p56
      %p58 = scmp.ne.s32.totalorder %s47, %s50
      %p59 = scmp.eq.s32.totalorder %s28, 3
      %p60 = por %p58, %p59
      %p61 = scmp.ne.s32.totalorder %s50, %s51
      %p62 = scmp.eq.s32.totalorder %s28, 0
      %p63 = por %p61, %p62
      %p64 = scmp.ne.s32.totalorder %s50, %s51
      %p65 = scmp.eq.s32.totalorder %s29, 3
      %p66 = por %p64, %p65
      %p68 = scmp.ne.s32.totalorder %s51, %s67
      %p69 = scmp.eq.s32.totalorder %s29, 0
      %p70 = por %p68, %p69
      %s72 = sadd.s32 %s71, 1
      %p75 = scmp.eq.s32.totalorder %s23, 3
      %p76 = scmp.ne.s32.totalorder %s71, %s73
      %p77 = scmp.eq.s32.totalorder %s23, 0
      %p78 = por %p76, %p77
      %p79 = scmp.ne.s32.totalorder %s71, %s73
      %p80 = scmp.eq.s32.totalorder %s28, 3
      %p81 = por %p79, %p80
      %p82 = scmp.ne.s32.totalorder %s73, %s74
      %p83 = scmp.eq.s32.totalorder %s28, 0
      %p84 = por %p82, %p83
      %p85 = scmp.ne.s32.totalorder %s73, %s74
      %p86 = scmp.eq.s32.totalorder %s29, 3
      %p87 = por %p85, %p86
      %p89 = scmp.ne.s32.totalorder %s74, %s88
      %p90 = scmp.eq.s32.totalorder %s29, 0
      %p91 = por %p89, %p90
      %s93 = sadd.s32 %s92, 1
      %p96 = scmp.eq.s32.totalorder %s23, 3
      %p97 = scmp.ne.s32.totalorder %s92, %s94
      %p98 = scmp.eq.s32.totalorder %s23, 0
      %p99 = por %p97, %p98
      %p100 = scmp.ne.s32.totalorder %s92, %s94
      %p101 = scmp.eq.s32.totalorder %s28, 3
      %p102 = por %p100, %p101
      %p103 = scmp.ne.s32.totalorder %s94, %s95
      %p104 = scmp.eq.s32.totalorder %s28, 0
      %p105 = por %p103, %p104
      %p106 = scmp.ne.s32.totalorder %s94, %s95
      %p107 = scmp.eq.s32.totalorder %s29, 3
      %p108 = por %p106, %p107
      %p110 = scmp.ne.s32.totalorder %s95, %s109
      %p111 = scmp.eq.s32.totalorder %s29, 0
      %p112 = por %p110, %p111
      %s114 = sadd.s32 %s113, 1
      %p117 = scmp.eq.s32.totalorder %s23, 3
      %p118 = scmp.ne.s32.totalorder %s113, %s115
      %p119 = scmp.eq.s32.totalorder %s23, 0
      %p120 = por %p118, %p119
      %p121 = scmp.ne.s32.totalorder %s113, %s115
      %p122 = scmp.eq.s32.totalorder %s28, 3
      %p123 = por %p121, %p122
      %p124 = scmp.ne.s32.totalorder %s115, %s116
      %p125 = scmp.eq.s32.totalorder %s28, 0
      %p126 = por %p124, %p125
      %p127 = scmp.ne.s32.totalorder %s115, %s116
      %p128 = scmp.eq.s32.totalorder %s29, 3
      %p129 = por %p127, %p128
      %p131 = scmp.ne.s32.totalorder %s116, %s130
      %p132 = scmp.eq.s32.totalorder %s29, 0
      %p133 = por %p131, %p132
      %s134 = ssub.s32 %s30, %s42
      %s135 = ssub.s32 %s31, %s38
      %s136 = sor.u32 %s134, %s135
      %p137 = scmp.eq.s32.totalorder %s136, 0
      %s139 = sadd.s32 %s138, 1
      %s140 = scalar_select %p137, %s138, %s139
      %p143 = pneg %p137
      %p144 = scmp.eq.s32.totalorder %s23, 3
      %p145 = por %p143, %p144
      %p146 = scmp.ne.s32.totalorder %s138, %s141
      %p147 = scmp.eq.s32.totalorder %s23, 0
      %p148 = por %p146, %p147
      %p149 = scmp.ne.s32.totalorder %s138, %s141
      %p150 = scmp.eq.s32.totalorder %s28, 3
      %p151 = por %p149, %p150
      %p152 = scmp.ne.s32.totalorder %s141, %s142
      %p153 = scmp.eq.s32.totalorder %s28, 0
      %p154 = por %p152, %p153
      %p155 = scmp.ne.s32.totalorder %s141, %s142
      %p156 = scmp.eq.s32.totalorder %s29, 3
      %p157 = por %p155, %p156
      %p159 = scmp.ne.s32.totalorder %s142, %s158
      %p160 = scmp.eq.s32.totalorder %s29, 0
      %p161 = por %p159, %p160
      %s162 = ssub.s32 %s30, %s42
      %s163 = ssub.s32 %s31, %s38
      %s164 = sor.u32 %s162, %s163
      %p165 = scmp.eq.s32.totalorder %s164, 0
      %s167 = sadd.s32 %s166, 1
      %s168 = scalar_select %p165, %s166, %s167
      %p171 = pneg %p165
      %p172 = scmp.eq.s32.totalorder %s23, 3
      %p173 = por %p171, %p172
      %p174 = scmp.ne.s32.totalorder %s166, %s169
      %p175 = scmp.eq.s32.totalorder %s23, 0
      %p176 = por %p174, %p175
      %p177 = scmp.ne.s32.totalorder %s166, %s169
      %p178 = scmp.eq.s32.totalorder %s28, 3
      %p179 = por %p177, %p178
      %p180 = scmp.ne.s32.totalorder %s169, %s170
      %p181 = scmp.eq.s32.totalorder %s28, 0
      %p182 = por %p180, %p181
      %p183 = scmp.ne.s32.totalorder %s169, %s170
      %p184 = scmp.eq.s32.totalorder %s29, 3
      %p185 = por %p183, %p184
      %p187 = scmp.ne.s32.totalorder %s170, %s186
      %p188 = scmp.eq.s32.totalorder %s29, 0
      %p189 = por %p187, %p188
      %p190 = scmp.le.s32.totalorder 1, %s23
      %p191 = scmp.lt.s32.totalorder %s23, 5
      %p192 = pnand %p190, %p191
      %p193 = pneg %p192
      // Predicated region
      $region9: #{tpu_custom_call.1} parent=5 // pred_check
        _
      $region10: #{tpu_custom_call.1} parent=5 // pred_check_branch
        %195 = sbr.rel (%p192) target = $region12
      $region11: #{tpu_custom_call.1} parent=5 // pred_region
        %s196 = ssub.s32 %s23, 1
        // Predicated region
        $region13: #{tpu_custom_call.1} parent=11 // pred_check
          %p197 = pneg %p84
        $region14: #{tpu_custom_call.1} parent=11 // pred_check_branch
          %199 = sbr.rel (%p197) target = $region16
        $region15: #{tpu_custom_call.1} parent=11 // pred_region
          %s201 = ssub.s32 256, 256
          %202 = vsyncadd [#allocation6], %s201
          %s203 = sshll.u32 [#allocation5], 4
          %s204 = int_to_ptr.vmem [resolvable:$true] %s203
          %209 = dma.hbm_to_vmem [thread:$0]  %s1, 256, %s204, [#allocation6], 64, 64, 4
        $region16: #{tpu_custom_call.1} parent=11 // pred_fallthru
          _
        // Predicated region
        $region17: #{tpu_custom_call.1} parent=11 // pred_check
          %p210 = pneg %p105
        $region18: #{tpu_custom_call.1} parent=11 // pred_check_branch
          %212 = sbr.rel (%p210) target = $region20
        $region19: #{tpu_custom_call.1} parent=11 // pred_region
          %s214 = ssub.s32 128, 128
          %215 = vsyncadd [#allocation6], %s214
          %s216 = sshll.u32 [#allocation7], 4
          %s217 = int_to_ptr.vmem [resolvable:$true] %s216
          %222 = dma.hbm_to_vmem [thread:$0]  %s2, 128, %s217, [#allocation6], 64, 64, 4
        $region20: #{tpu_custom_call.1} parent=11 // pred_fallthru
          _
        // Predicated region
        $region21: #{tpu_custom_call.1} parent=11 // pred_check
          %p223 = pneg %p126
        $region22: #{tpu_custom_call.1} parent=11 // pred_check_branch
          %225 = sbr.rel (%p223) target = $region24
        $region23: #{tpu_custom_call.1} parent=11 // pred_region
          %s227 = ssub.s32 256, 256
          %228 = vsyncadd [#allocation9], %s227
          %s229 = sshll.u32 [#allocation8], 4
          %s230 = int_to_ptr.vmem [resolvable:$true] %s229
          %235 = dma.hbm_to_vmem [thread:$0]  %s3, 256, %s230, [#allocation9], 128, 128, 8
        $region24: #{tpu_custom_call.1} parent=11 // pred_fallthru
          _
      $region12: #{tpu_custom_call.1} parent=5 // pred_fallthru
        _
      %p236 = scmp.lt.s32.totalorder %s23, 4
      // Predicated region
      $region25: #{tpu_custom_call.1} parent=5 // pred_check
        %p237 = pneg %p236
      $region26: #{tpu_custom_call.1} parent=5 // pred_check_branch
        %239 = sbr.rel (%p237) target = $region28
      $region27: #{tpu_custom_call.1} parent=5 // pred_region
        // Predicated region
        $region29: #{tpu_custom_call.1} parent=27 // pred_check
          %p240 = pneg %p57
        $region30: #{tpu_custom_call.1} parent=27 // pred_check_branch
          %242 = sbr.rel (%p240) target = $region32
        $region31: #{tpu_custom_call.1} parent=27 // pred_region
          %s243 = sand.u32 %s47, 1
          %s244 = scalar_lea.sflag [#allocation3], %s243
          %s245 = sand.u32 %s47, 1
          %s246 = smul.addr %s245, 4
          %s247 = scalar_lea.vmem [#allocation2], %s246
          %s249 = ssub.s32 64, 64
          %250 = vsyncadd %s244, %s249
          %s251 = smul.addr %s30, 2
          %s252 = sadd.s32 %s31, %s251
          %s253 = smul.addr %s252, 64
          %s254 = scalar_lea.hbm %s0, %s253
          %s256 = sshll.u32 %s247, 4
          %s257 = int_to_ptr.vmem [resolvable:$true] %s256
          %259 = dma.hbm_to_vmem [thread:$0]  %s254, 64, %s257, %s244
        $region32: #{tpu_custom_call.1} parent=27 // pred_fallthru
          _
      $region28: #{tpu_custom_call.1} parent=5 // pred_fallthru
        _
      %p260 = scmp.le.s32.totalorder 1, %s23
      %p261 = scmp.lt.s32.totalorder %s23, 5
      %p262 = pnand %p260, %p261
      %p263 = pneg %p262
      // Predicated region
      $region33: #{tpu_custom_call.1} parent=5 // pred_check
        _
      $region34: #{tpu_custom_call.1} parent=5 // pred_check_branch
        %265 = sbr.rel (%p262) target = $region36
      $region35: #{tpu_custom_call.1} parent=5 // pred_region
        %s266 = ssub.s32 %s23, 1
        %s267 = sand.u32 %s50, 1
        %s268 = scalar_lea.sflag [#allocation3], %s267
        %s269 = sand.u32 %s50, 1
        %s270 = smul.addr %s269, 4
        %s271 = scalar_lea.vmem [#allocation2], %s270
        // Predicated region
        $region37: #{tpu_custom_call.1} parent=35 // pred_check
          %p272 = pneg %p63
        $region38: #{tpu_custom_call.1} parent=35 // pred_check_branch
          %274 = sbr.rel (%p272) target = $region40
        $region39: #{tpu_custom_call.1} parent=35 // pred_region
          %275 = dma.done %s268, 64
        $region40: #{tpu_custom_call.1} parent=35 // pred_fallthru
          _
        // Predicated region
        $region41: #{tpu_custom_call.1} parent=35 // pred_check
          %p276 = pneg %p84
        $region42: #{tpu_custom_call.1} parent=35 // pred_check_branch
          %278 = sbr.rel (%p276) target = $region44
        $region43: #{tpu_custom_call.1} parent=35 // pred_region
          %279 = dma.done [#allocation6], 256
        $region44: #{tpu_custom_call.1} parent=35 // pred_fallthru
          _
        // Predicated region
        $region45: #{tpu_custom_call.1} parent=35 // pred_check
          %p280 = pneg %p105
        $region46: #{tpu_custom_call.1} parent=35 // pred_check_branch
          %282 = sbr.rel (%p280) target = $region48
        $region47: #{tpu_custom_call.1} parent=35 // pred_region
          %283 = dma.done [#allocation6], 128
        $region48: #{tpu_custom_call.1} parent=35 // pred_fallthru
          _
        // Predicated region
        $region49: #{tpu_custom_call.1} parent=35 // pred_check
          %p284 = pneg %p126
        $region50: #{tpu_custom_call.1} parent=35 // pred_check_branch
          %286 = sbr.rel (%p284) target = $region52
        $region51: #{tpu_custom_call.1} parent=35 // pred_region
          %287 = dma.done [#allocation9], 256
        $region52: #{tpu_custom_call.1} parent=35 // pred_fallthru
          _
        %s288 = sand.u32 %s50, 1
        %s289 = scalar_lea.sflag [#allocation3], %s288
        %s290 = sand.u32 %s50, 1
        %s291 = smul.addr %s290, 4
        %s292 = scalar_lea.vmem [#allocation2], %s291
        %p293 = pneg %p63
        %p294 = pneg %p60
        %p295 = pneg %p84
        %p296 = pneg %p81
        %p297 = pneg %p105
        %p298 = pneg %p102
        %p299 = pneg %p126
        %p300 = pneg %p123
        %p301 = pneg %p154
        %p302 = pneg %p151
        %s303 = sand.u32 %s141, 1
        %s304 = scalar_lea.sflag [#allocation4], %s303
        %s305 = sand.u32 %s141, 1
        %s306 = smul.addr %s305, 8
        %s307 = scalar_lea.vmem [#allocation10], %s306
        %p308 = pneg %p182
        %p309 = pneg %p179
        %s310 = sand.u32 %s169, 1
        %s311 = scalar_lea.sflag [#allocation12], %s310
        %s312 = sand.u32 %s169, 1
        %s313 = smul.addr %s312, 64
        %s314 = scalar_lea.vmem [#allocation11], %s313
        %s315 = smul.u32 16, %s33
        %v317 = vld [vmem:[%s271] sm:$0xf]
        %v318 = vld [vmem:[#allocation8] sm:$0xff]
        %v319 = vld [vmem:[#allocation8 + $0x8] sm:$0xff]
        %v320 = vld [vmem:[#allocation5] sm:$0xf]
        %v321 = vld [vmem:[#allocation5 + $0x4] sm:$0xf]
        %v322 = vld [vmem:[#allocation5 + $0x8] sm:$0xf]
        %v323 = vld [vmem:[#allocation5 + $0xc] sm:$0xf]
        %v328 = vunpack.c.l.b16 %v320
        %v329 = vunpack.c.l.b16 %v321
        %v330 = vunpack.c.l.b16 %v322
        %v331 = vunpack.c.l.b16 %v323
        %v332 = vpack.c.b16 %v329, %v328
        %v333 = vpack.c.b16 %v331, %v330
        %vm334 = vcmask 64512
        %v336 = vsel %vm334, %v332, 0
        %v339 = vsel %vm334, %v333, 0
        %vm341 = vcmask 1043456
        %v343 = vsel %vm341, %v317, 0
        %345 = vmatprep.subr.bf16.mxu0 0
        %346 = vmatpush1.bf16.msra.mxu0 %v343
        %347 = vmatprep.subr.bf16.mxu0 0
        %348 = vmatpush1.bf16.msra.mxu0 0
        %349 = vmatprep.subr.bf16.mxu0 0
        %350 = vmatpush1.bf16.msra.mxu0 0
        %351 = vmatprep.subr.bf16.mxu0 0
        %352 = vmatpush1.bf16.msra.mxu0 0
        %353 = vmatprep.subr.bf16.mxu0 0
        %354 = vmatpush1.bf16.msra.mxu0 0
        %355 = vmatprep.subr.bf16.mxu0 0
        %356 = vmatpush1.bf16.msra.mxu0 0
        %357 = vmatprep.subr.bf16.mxu0 0
        %358 = vmatpush1.bf16.msra.mxu0 0
        %359 = vmatprep.subr.bf16.mxu0 0
        %360 = vmatpush1.bf16.msra.mxu0 0
        %361 = vmatprep.subr.bf16.mxu0 0
        %362 = vmatpush1.bf16.msra.mxu0 0
        %363 = vmatprep.subr.bf16.mxu0 0
        %364 = vmatpush1.bf16.msra.mxu0 0
        %365 = vmatprep.subr.bf16.mxu0 0
        %366 = vmatpush1.bf16.msra.mxu0 0
        %367 = vmatprep.subr.bf16.mxu0 0
        %368 = vmatpush1.bf16.msra.mxu0 0
        %369 = vmatprep.subr.bf16.mxu0 0
        %370 = vmatpush1.bf16.msra.mxu0 0
        %371 = vmatprep.subr.bf16.mxu0 0
        %372 = vmatpush1.bf16.msra.mxu0 0
        %373 = vmatprep.subr.bf16.mxu0 0
        %374 = vmatpush1.bf16.msra.mxu0 0
        %375 = vmatprep.subr.bf16.mxu0 0
        %376 = vmatpush1.bf16.msra.mxu0 0
        %377 = vmatprep.mubr.bf16.mxu0 0
        %378 = vmatmul.mubr.bf16.gmra.mrb[0].mxu0 %v336
        %v379 = vpop.f32.mrb[0].mxu0
        %v380 = vadd.f32 0.0, %v379
        %v381 = vpop.f32.mrb[0].mxu0
        %v382 = vpop.f32.mrb[0].mxu0
        %v383 = vadd.f32 0.0, %v382
        %v384 = vpop.f32.mrb[0].mxu0
        %385 = vmatprep.mubr.bf16.mxu0 0
        %386 = vmatmul.mubr.bf16.gmra.mrb[0].mxu0 %v339
        %v387 = vpop.f32.mrb[0].mxu0
        %v388 = vadd.f32 0.0, %v387
        %v389 = vpop.f32.mrb[0].mxu0
        %v390 = vpop.f32.mrb[0].mxu0
        %v391 = vadd.f32 0.0, %v390
        %v392 = vpop.f32.mrb[0].mxu0
        %393 = vdwg.mxu0
        %395 = vset.pattern.permute.xlu0 0
        %396 = vperm.xlu0 %395, %v318
        %v397 = vpop.permute.xlu0 %396
        %400 = vset.pattern.permute.xlu0 0
        %401 = vperm.xlu0 %400, %v319
        %v402 = vpop.permute.xlu0 %401
        %v404 = vadd.f32 %v380, %v397
        %v405 = vadd.f32 %v383, %v402
        %v406 = vmax.f32 %v404, 0.0
        %v407 = vmax.f32 %v405, 0.0
        %v408 = vld [vmem:[#allocation7] sm:$0xf]
        %v409 = vld [vmem:[#allocation7 + $0x4] sm:$0xf]
        %v410 = vpack.c.bf16 %v407, %v406
        %411 = vset.pattern.permute.xlu0 1
        %412 = vperm.xlu0 %411, %v318
        %v413 = vpop.permute.xlu0 %412
        %415 = vset.pattern.permute.xlu0 1
        %416 = vperm.xlu0 %415, %v319
        %v417 = vpop.permute.xlu0 %416
        %v421 = vunpack.c.l.b16 %v408
        %v422 = vunpack.c.l.b16 %v409
        %v423 = vpack.c.b16 %v422, %v421
        %vm424 = vcmask 130048
        %v426 = vsel %vm424, %v423, 0
        %428 = vmatprep.subr.bf16.mxu0 0
        %429 = vmatpush1.bf16.msra.mxu0 %v410
        %430 = vmatprep.subr.bf16.mxu0 0
        %431 = vmatpush1.bf16.msra.mxu0 0
        %432 = vmatprep.subr.bf16.mxu0 0
        %433 = vmatpush1.bf16.msra.mxu0 0
        %434 = vmatprep.subr.bf16.mxu0 0
        %435 = vmatpush1.bf16.msra.mxu0 0
        %436 = vmatprep.subr.bf16.mxu0 0
        %437 = vmatpush1.bf16.msra.mxu0 0
        %438 = vmatprep.subr.bf16.mxu0 0
        %439 = vmatpush1.bf16.msra.mxu0 0
        %440 = vmatprep.subr.bf16.mxu0 0
        %441 = vmatpush1.bf16.msra.mxu0 0
        %442 = vmatprep.subr.bf16.mxu0 0
        %443 = vmatpush1.bf16.msra.mxu0 0
        %444 = vmatprep.subr.bf16.mxu0 0
        %445 = vmatpush1.bf16.msra.mxu0 0
        %446 = vmatprep.subr.bf16.mxu0 0
        %447 = vmatpush1.bf16.msra.mxu0 0
        %448 = vmatprep.subr.bf16.mxu0 0
        %449 = vmatpush1.bf16.msra.mxu0 0
        %450 = vmatprep.subr.bf16.mxu0 0
        %451 = vmatpush1.bf16.msra.mxu0 0
        %452 = vmatprep.subr.bf16.mxu0 0
        %453 = vmatpush1.bf16.msra.mxu0 0
        %454 = vmatprep.subr.bf16.mxu0 0
        %455 = vmatpush1.bf16.msra.mxu0 0
        %456 = vmatprep.subr.bf16.mxu0 0
        %457 = vmatpush1.bf16.msra.mxu0 0
        %458 = vmatprep.subr.bf16.mxu0 0
        %459 = vmatpush1.bf16.msra.mxu0 0
        %460 = vmatprep.mubr.bf16.mxu0 0
        %461 = vmatmul.mubr.bf16.gmra.mrb[0].mxu0 %v426
        %v462 = vpop.f32.mrb[0].mxu0
        %v463 = vadd.f32 %v413, %v462
        %v464 = vpop.f32.mrb[0].mxu0
        %v465 = vpop.f32.mrb[0].mxu0
        %v466 = vadd.f32 %v417, %v465
        %v467 = vpop.f32.mrb[0].mxu0
        %468 = vdwg.mxu0
        %v469 = vmax.f32 %v463, 0.0
        %v470 = vmax.f32 %v466, 0.0
        %v471 = vpack.c.bf16 %v470, %v469
        %v473 = vunpack.c.l.b16 %v471
        %v474 = vunpack.c.h.b16 %v471
        %v475 = vpack.c.b16 %v473, %v473
        %v476 = vpack.c.b16 %v474, %v474
        %479 = vst [vmem:[%s307] sm:$0xf] %v475
        %480 = vst [vmem:[%s307 + $0x4] sm:$0xf] %v476
        %481 = vxpose.xlu0.b32.start [1/16] %v388, 128
        %482 = vxpose.xlu0.b32.cont [2/16] %v391, 128
        %483 = vxpose.xlu0.b32.cont [3/16] 0.0, 128
        %484 = vxpose.xlu0.b32.cont [4/16] 0.0, 128
        %485 = vxpose.xlu0.b32.cont [5/16] 0.0, 128
        %486 = vxpose.xlu0.b32.cont [6/16] 0.0, 128
        %487 = vxpose.xlu0.b32.cont [7/16] 0.0, 128
        %488 = vxpose.xlu0.b32.cont [8/16] 0.0, 128
        %489 = vxpose.xlu0.b32.cont [9/16] 0.0, 128
        %490 = vxpose.xlu0.b32.cont [10/16] 0.0, 128
        %491 = vxpose.xlu0.b32.cont [11/16] 0.0, 128
        %492 = vxpose.xlu0.b32.cont [12/16] 0.0, 128
        %493 = vxpose.xlu0.b32.cont [13/16] 0.0, 128
        %494 = vxpose.xlu0.b32.cont [14/16] 0.0, 128
        %495 = vxpose.xlu0.b32.cont [15/16] 0.0, 128
        %496 = vxpose.xlu0.b32.end [16/16] 0.0, 128
        %v497 = vpop.trf.xlu0
        %v498 = vpop.trf.xlu0
        %v499 = vpop.trf.xlu0
        %v500 = vpop.trf.xlu0
        %v501 = vpop.trf.xlu0
        %v502 = vpop.trf.xlu0
        %v503 = vpop.trf.xlu0
        %v504 = vpop.trf.xlu0
        %v505 = vpop.trf.xlu0
        %v506 = vpop.trf.xlu0
        %v507 = vpop.trf.xlu0
        %v508 = vpop.trf.xlu0
        %v509 = vpop.trf.xlu0
        %v510 = vpop.trf.xlu0
        %v511 = vpop.trf.xlu0
        %v512 = vpop.trf.xlu0
        %v513 = vpack.c.bf16 %v498, %v497
        %v514 = vpack.c.bf16 %v500, %v499
        %v515 = vpack.c.bf16 %v502, %v501
        %v516 = vpack.c.bf16 %v504, %v503
        %v517 = vpack.c.bf16 %v506, %v505
        %v518 = vpack.c.bf16 %v508, %v507
        %v519 = vpack.c.bf16 %v510, %v509
        %v520 = vpack.c.bf16 %v512, %v511
        %v529 = vunpack.c.l.b16 %v513
        %v530 = vunpack.c.h.b16 %v513
        %v531 = vunpack.c.l.b16 %v514
        %v532 = vunpack.c.h.b16 %v514
        %v533 = vunpack.c.l.b16 %v515
        %v534 = vunpack.c.h.b16 %v515
        %v535 = vunpack.c.l.b16 %v516
        %v536 = vunpack.c.h.b16 %v516
        %v537 = vunpack.c.l.b16 %v517
        %v538 = vunpack.c.h.b16 %v517
        %v539 = vunpack.c.l.b16 %v518
        %v540 = vunpack.c.h.b16 %v518
        %v541 = vunpack.c.l.b16 %v519
        %v542 = vunpack.c.h.b16 %v519
        %v543 = vunpack.c.l.b16 %v520
        %v544 = vunpack.c.h.b16 %v520
        %v545 = vpack.c.b16 %v529, %v529
        %v546 = vpack.c.b16 %v530, %v530
        %v547 = vpack.c.b16 %v531, %v531
        %v548 = vpack.c.b16 %v532, %v532
        %v549 = vpack.c.b16 %v533, %v533
        %v550 = vpack.c.b16 %v534, %v534
        %v551 = vpack.c.b16 %v535, %v535
        %v552 = vpack.c.b16 %v536, %v536
        %v553 = vpack.c.b16 %v537, %v537
        %v554 = vpack.c.b16 %v538, %v538
        %v555 = vpack.c.b16 %v539, %v539
        %v556 = vpack.c.b16 %v540, %v540
        %v557 = vpack.c.b16 %v541, %v541
        %v558 = vpack.c.b16 %v542, %v542
        %v559 = vpack.c.b16 %v543, %v543
        %v560 = vpack.c.b16 %v544, %v544
        %vm577 = vcmask 125952
        %578 = vst.msk [vmem:[%s314] sm:$0xf] %vm577, %v545
        %579 = vst.msk [vmem:[%s314 + $0x4] sm:$0xf] %vm577, %v546
        %580 = vst.msk [vmem:[%s314 + $0x8] sm:$0xf] %vm577, %v547
        %581 = vst.msk [vmem:[%s314 + $0xc] sm:$0xf] %vm577, %v548
        %582 = vst.msk [vmem:[%s314 + $0x10] sm:$0xf] %vm577, %v549
        %583 = vst.msk [vmem:[%s314 + $0x14] sm:$0xf] %vm577, %v550
        %584 = vst.msk [vmem:[%s314 + $0x18] sm:$0xf] %vm577, %v551
        %585 = vst.msk [vmem:[%s314 + $0x1c] sm:$0xf] %vm577, %v552
        %586 = vst.msk [vmem:[%s314 + $0x20] sm:$0xf] %vm577, %v553
        %587 = vst.msk [vmem:[%s314 + $0x24] sm:$0xf] %vm577, %v554
        %588 = vst.msk [vmem:[%s314 + $0x28] sm:$0xf] %vm577, %v555
        %589 = vst.msk [vmem:[%s314 + $0x2c] sm:$0xf] %vm577, %v556
        %590 = vst.msk [vmem:[%s314 + $0x30] sm:$0xf] %vm577, %v557
        %591 = vst.msk [vmem:[%s314 + $0x34] sm:$0xf] %vm577, %v558
        %592 = vst.msk [vmem:[%s314 + $0x38] sm:$0xf] %vm577, %v559
        %593 = vst.msk [vmem:[%s314 + $0x3c] sm:$0xf] %vm577, %v560
        %s594 = sand.u32 %s141, 1
        %s595 = scalar_lea.sflag [#allocation4], %s594
        %s596 = sand.u32 %s141, 1
        %s597 = smul.addr %s596, 8
        %s598 = scalar_lea.vmem [#allocation10], %s597
        %s599 = sand.u32 %s169, 1
        %s600 = scalar_lea.sflag [#allocation12], %s599
        %s601 = sand.u32 %s169, 1
        %s602 = smul.addr %s601, 64
        %s603 = scalar_lea.vmem [#allocation11], %s602
        // Predicated region
        $region53: #{tpu_custom_call.1} parent=35 // pred_check
          %p604 = pneg %p151
        $region54: #{tpu_custom_call.1} parent=35 // pred_check_branch
          %606 = sbr.rel (%p604) target = $region56
        $region55: #{tpu_custom_call.1} parent=35 // pred_region
          %s608 = ssub.s32 128, 128
          %609 = vsyncadd %s595, %s608
          %s610 = smul.addr %s32, 4
          %s611 = sadd.s32 %s33, %s610
          %s612 = smul.addr %s611, 64
          %s613 = scalar_lea.hbm %s4, %s612
          %s614 = sshll.u32 %s598, 4
          %s615 = int_to_ptr.vmem [resolvable:$true] %s614
          %620 = dma.vmem_to_hbm [thread:$0]  %s615, 128, %s613, %s595, 64, 128, 4
        $region56: #{tpu_custom_call.1} parent=35 // pred_fallthru
          _
        // Predicated region
        $region57: #{tpu_custom_call.1} parent=35 // pred_check
          %p621 = pneg %p179
        $region58: #{tpu_custom_call.1} parent=35 // pred_check_branch
          %623 = sbr.rel (%p621) target = $region60
        $region59: #{tpu_custom_call.1} parent=35 // pred_region
          %s624 = smul.u32 16, %s33
          %s626 = ssub.s32 1024, 1024
          %627 = vsyncadd %s600, %s626
          %s628 = smul.addr %s32, 32
          %s629 = sadd.s32 %s624, %s628
          %s630 = smul.addr %s629, 64
          %s631 = scalar_lea.hbm %s5, %s630
          %s632 = sshll.u32 %s603, 4
          %s633 = int_to_ptr.vmem [resolvable:$true] %s632
          %638 = dma.vmem_to_hbm [thread:$0]  %s633, 1024, %s631, %s600, 64, 64, 4
        $region60: #{tpu_custom_call.1} parent=35 // pred_fallthru
          _
      $region36: #{tpu_custom_call.1} parent=5 // pred_fallthru
        _
      %p639 = scmp.le.s32.totalorder 2, %s23
      // Predicated region
      $region61: #{tpu_custom_call.1} parent=5 // pred_check
        %p640 = pneg %p639
      $region62: #{tpu_custom_call.1} parent=5 // pred_check_branch
        %642 = sbr.rel (%p640) target = $region64
      $region63: #{tpu_custom_call.1} parent=5 // pred_region
        %s643 = ssub.s32 %s23, 2
        // Predicated region
        $region65: #{tpu_custom_call.1} parent=63 // pred_check
          %p644 = pneg %p157
        $region66: #{tpu_custom_call.1} parent=63 // pred_check_branch
          %646 = sbr.rel (%p644) target = $region68
        $region67: #{tpu_custom_call.1} parent=63 // pred_region
          %s647 = sand.u32 %s142, 1
          %s648 = scalar_lea.sflag [#allocation4], %s647
          %s649 = sand.u32 %s142, 1
          %s650 = smul.addr %s649, 8
          %s651 = scalar_lea.vmem [#allocation10], %s650
          %652 = dma.done %s648, 128
        $region68: #{tpu_custom_call.1} parent=63 // pred_fallthru
          _
        // Predicated region
        $region69: #{tpu_custom_call.1} parent=63 // pred_check
          %p653 = pneg %p185
        $region70: #{tpu_custom_call.1} parent=63 // pred_check_branch
          %655 = sbr.rel (%p653) target = $region72
        $region71: #{tpu_custom_call.1} parent=63 // pred_region
          %s656 = sand.u32 %s170, 1
          %s657 = scalar_lea.sflag [#allocation12], %s656
          %s658 = sand.u32 %s170, 1
          %s659 = smul.addr %s658, 64
          %s660 = scalar_lea.vmem [#allocation11], %s659
          %661 = dma.done %s657, 1024
        $region72: #{tpu_custom_call.1} parent=63 // pred_fallthru
          _
      $region64: #{tpu_custom_call.1} parent=5 // pred_fallthru
        _
    $region6: #{tpu_custom_call.1} parent=1 // loop_footer
      %s27 = sadd.s32 1, %s23
    $region7: #{tpu_custom_call.1} parent=1 // loop_footer_branch
      %22 = sbr.rel target = $region3
    $region8: #{tpu_custom_call.1} parent=1 // loop_exit
      _
    %662 = vsyncpa [#allocation3], 1
    %s663 = scalar_lea.sflag [#allocation3], 1
    %664 = vsyncpa %s663, 1
    %665 = vsyncpa [#allocation6], 1
    %666 = vsyncpa [#allocation9], 1
    %667 = vsyncpa [#allocation4], 1
    %s668 = scalar_lea.sflag [#allocation4], 1
    %669 = vsyncpa %s668, 1
    %670 = vsyncpa [#allocation12], 1
    %s671 = scalar_lea.sflag [#allocation12], 1
    %672 = vsyncpa %s671, 1

</llo_original>
